<compile_context>
chip_gen: v7x
topology: tpu7x:2x2x1
jax: 0.10.0
libtpu: 0.0.40
codegen_flags: <defaults>
</compile_context>

<pallas_src>
import functools

import jax
import jax.numpy as jnp
from jax.experimental import pallas as pl
from jax.experimental.pallas import tpu as pltpu


# ----------------------------------------------------------------------------
# Kernels
# ----------------------------------------------------------------------------
def _gin_layer1_kernel(adj_ref, xp_ref, b1_ref, w2_ref, b2_ref, o_ref,
                       acc_ref, *, eps):
    """conv1: MLP(A'@x) with Lin1 reassociated/hoisted (xp = x@W1 precomputed).

    grid = (i: output row tile, parallel; k: adjacency column tile, reduction).
    adjacency holds int8 edge counts only; the (1+eps)*x self-loop term is
    added to the accumulator at k==0 (exact in f32).
    """
    tm, tk = adj_ref.shape
    i = pl.program_id(0)
    k = pl.program_id(1)

    @pl.when(k == 0)
    def _init():
        row = pl.multiple_of(i * tm, tm)
        acc_ref[...] = (1.0 + eps) * xp_ref[pl.ds(row, tm), :].astype(jnp.float32)

    col = pl.multiple_of(k * tk, tk)
    acc_ref[...] += jnp.dot(adj_ref[...].astype(jnp.bfloat16),
                            xp_ref[pl.ds(col, tk), :],
                            preferred_element_type=jnp.float32)

    @pl.when(k == pl.num_programs(1) - 1)
    def _finish():
        h = jnp.maximum(acc_ref[...] + b1_ref[...], 0.0)        # ReLU inside GIN MLP
        y = jnp.dot(h, w2_ref[...], preferred_element_type=jnp.float32) + b2_ref[...]
        o_ref[...] = jnp.maximum(y, 0.0).astype(o_ref.dtype)     # outer F.relu, bf16 store


def _gin_layer2_pool_kernel(adj_ref, h_ref, w1_ref, b1_ref, w2_ref, b2_ref,
                            pool_ref, o_ref, acc_ref, *, eps):
    """conv2 + per-row-tile mean-pool partials (no carried state across i).

    Each row tile i writes pooled partial P[:, tile i] @ MLP(A'@h1)[tile i] to
    its own output block, so i can be megacore-parallel; the tiny reduction
    over tiles + fc + log_softmax happens in a separate 1-step kernel.
    """
    tm, tk = adj_ref.shape
    i = pl.program_id(0)
    k = pl.program_id(1)

    @pl.when(k == 0)
    def _init():
        row = pl.multiple_of(i * tm, tm)
        acc_ref[...] = (1.0 + eps) * h_ref[pl.ds(row, tm), :].astype(jnp.float32)

    col = pl.multiple_of(k * tk, tk)
    acc_ref[...] += jnp.dot(adj_ref[...].astype(jnp.bfloat16),
                            h_ref[pl.ds(col, tk), :],
                            preferred_element_type=jnp.float32)

    @pl.when(k == pl.num_programs(1) - 1)
    def _finish():
        h = jnp.maximum(
            jnp.dot(acc_ref[...], w1_ref[...], preferred_element_type=jnp.float32)
            + b1_ref[...], 0.0)
        y = jnp.dot(h, w2_ref[...], preferred_element_type=jnp.float32) + b2_ref[...]
        # pooled partial for this row tile: (G, tm) @ (tm, 128); pool is f32/exact.
        o_ref[0] = jnp.dot(pool_ref[...], y, preferred_element_type=jnp.float32)


def _head_kernel(part_ref, wf_ref, bf_ref, o_ref):
    """sum pooled partials over row tiles -> fc -> log_softmax (single step)."""
    pooled = jnp.sum(part_ref[...], axis=0)                       # (G, 128)
    logits = jnp.dot(pooled, wf_ref[...],
                     preferred_element_type=jnp.float32) + bf_ref[...]
    m = jnp.max(logits, axis=1, keepdims=True)
    s = logits - m
    lse = jnp.log(jnp.sum(jnp.exp(s), axis=1, keepdims=True))
    o_ref[...] = (s - lse).astype(o_ref.dtype)


# ----------------------------------------------------------------------------
# helpers
# ----------------------------------------------------------------------------
def _pick_tile(n_pad, prefs):
    for t in prefs:
        if n_pad % t == 0:
            return t
    return 128


def _vmem_limit(est_bytes):
    """Scoped-VMEM budget: 2x the estimated plan, >=32 MiB, <=3/4 of physical."""
    try:
        phys = int(pltpu.get_tpu_info().vmem_capacity_bytes)
    except Exception:
        phys = 64 << 20
    return int(min(phys * 3 // 4, max(2 * est_bytes, 32 << 20)))


# ----------------------------------------------------------------------------
# pallas_call wrappers
# ----------------------------------------------------------------------------
def gin_layer1(adj, xp, b1, w2, b2, *, eps, tm, tk):
    n = adj.shape[0]
    c_in = xp.shape[1]     # 64 (already projected through W1)
    c_out = w2.shape[1]    # 64
    est = (2 * tm * tk                 # int8 adjacency, double-buffered
           + 2 * n * c_in * 2          # resident bf16 activations
           + tm * c_in * 4             # f32 accumulator
           + 2 * tm * c_out * 2        # bf16 output tile
           + (1 << 16))                # weights / biases
    return pl.pallas_call(
        functools.partial(_gin_layer1_kernel, eps=eps),
        out_shape=jax.ShapeDtypeStruct((n, c_out), jnp.bfloat16),
        grid=(n // tm, n // tk),                          # reduction axis last
        in_specs=[
            pl.BlockSpec((tm, tk), lambda i, k: (i, k)),             # int8 A tile
            pl.BlockSpec((n, c_in), lambda i, k: (0, 0)),            # resident x@W1 (bf16)
            pl.BlockSpec(b1.shape, lambda i, k: (0, 0)),             # weights stay
            pl.BlockSpec(w2.shape, lambda i, k: (0, 0)),             #   VMEM-resident
            pl.BlockSpec(b2.shape, lambda i, k: (0, 0)),
        ],
        out_specs=pl.BlockSpec((tm, c_out), lambda i, k: (i, 0)),
        scratch_shapes=[pltpu.VMEM((tm, c_in), jnp.float32)],
        compiler_params=pltpu.CompilerParams(
            dimension_semantics=("parallel", "arbitrary"),
            vmem_limit_bytes=_vmem_limit(est)),
    )(adj, xp, b1, w2, b2)


def gin_layer2_pool(adj, h, w1, b1, w2, b2, pool, *, eps, tm, tk):
    n = adj.shape[0]
    g = pool.shape[0]
    c_in = h.shape[1]      # 64
    c_out = w2.shape[1]    # 128
    ni = n // tm
    est = (2 * tm * tk                 # int8 adjacency, double-buffered
           + 2 * n * c_in * 2          # resident bf16 h1
           + tm * c_in * 4             # f32 accumulator
           + 2 * g * tm * 4            # pool column tile
           + 2 * g * c_out * 4         # pooled-partial output block
           + (1 << 16))
    return pl.pallas_call(
        functools.partial(_gin_layer2_pool_kernel, eps=eps),
        out_shape=jax.ShapeDtypeStruct((ni, g, c_out), jnp.float32),
        grid=(ni, n // tk),
        in_specs=[
            pl.BlockSpec((tm, tk), lambda i, k: (i, k)),             # int8 A tile
            pl.BlockSpec((n, c_in), lambda i, k: (0, 0)),            # resident bf16 h1
            pl.BlockSpec(w1.shape, lambda i, k: (0, 0)),
            pl.BlockSpec(b1.shape, lambda i, k: (0, 0)),
            pl.BlockSpec(w2.shape, lambda i, k: (0, 0)),
            pl.BlockSpec(b2.shape, lambda i, k: (0, 0)),
            pl.BlockSpec((g, tm), lambda i, k: (0, i)),              # f32 pool cols for tile i
        ],
        out_specs=pl.BlockSpec((1, g, c_out), lambda i, k: (i, 0, 0)),
        scratch_shapes=[pltpu.VMEM((tm, c_in), jnp.float32)],
        compiler_params=pltpu.CompilerParams(
            # i is parallel now (no carried pooled accumulator) -> v7x megacore OK.
            dimension_semantics=("parallel", "arbitrary"),
            vmem_limit_bytes=_vmem_limit(est)),
    )(adj, h, w1, b1, w2, b2, pool)


def gin_head(partials, wf, bf):
    ni, g, c = partials.shape
    n_cls = wf.shape[1]
    return pl.pallas_call(
        _head_kernel,
        out_shape=jax.ShapeDtypeStruct((g, n_cls), jnp.float32),
        grid=(1,),
        in_specs=[
            pl.BlockSpec((ni, g, c), lambda i: (0, 0, 0)),
            pl.BlockSpec(wf.shape, lambda i: (0, 0)),
            pl.BlockSpec(bf.shape, lambda i: (0, 0)),
        ],
        out_specs=pl.BlockSpec((g, n_cls), lambda i: (0, 0)),
    )(partials, wf, bf)


# ----------------------------------------------------------------------------
# Full GIN forward (glue: padding, int8 adjacency scatter, f32 pool matrix)
# ----------------------------------------------------------------------------
def gin_forward(x, edge_index, batch, params, num_graphs, *, eps=0.0,
                tm=None, tk=None):
    n = x.shape[0]
    n_pad = -(-n // 128) * 128
    pad = n_pad - n
    if tm is None:
        tm = _pick_tile(n_pad, (512, 256, 128))
    if tk is None:
        tk = _pick_tile(n_pad, (1024, 512, 256, 128))
    assert n_pad % tm == 0 and n_pad % tk == 0

    src, dst = edge_index[0], edge_index[1]
    # int8 edge-count adjacency, built with a single scatter (no eye / add / cast).
    # Self loop (1+eps)*x is added to the f32 accumulator in-kernel instead.
    # TODO(synk): edge multiplicities > 127 would overflow int8; fall back to bf16 then.
    adj = jnp.zeros((n_pad, n_pad), jnp.int8).at[dst, src].add(jnp.int8(1))

    x_p = jnp.pad(x.astype(jnp.float32), ((0, pad), (0, 0)))
    # conv1's Lin1 reassociated through the (linear) aggregation and hoisted out
    # of the kernel loop: Lin1(A'@x) = A'@(x@W1) + b1.
    xp = (x_p @ params["w1a"]).astype(jnp.bfloat16)

    # f32 mean-pool matrix over real nodes (padded nodes get graph id G -> zero column).
    batch_p = jnp.concatenate(
        [batch.astype(jnp.int32), jnp.full((pad,), num_graphs, jnp.int32)])
    onehot = (batch_p[None, :] == jnp.arange(num_graphs)[:, None]).astype(jnp.float32)
    pool = onehot / jnp.maximum(jnp.sum(onehot, axis=1, keepdims=True), 1.0)

    # conv1 + outer ReLU  -> bf16 h1
    h1 = gin_layer1(adj, xp, params["b1a"], params["w1b"], params["b1b"],
                    eps=eps, tm=tm, tk=tk)
    # TODO(synk): Dropout(0.5) is identity in eval mode; training-mode RNG dropout omitted.
    # conv2 + per-row-tile mean-pool partials
    partials = gin_layer2_pool(adj, h1,
                               params["w2a"], params["b2a"],
                               params["w2b"], params["b2b"], pool,
                               eps=eps, tm=tm, tk=tk)
    # sum partials + fc + log_softmax
    return gin_head(partials, params["wfc"], params["bfc"])


# ----------------------------------------------------------------------------
# Pure-JAX reference (f32, un-tiled) for correctness checking
# ----------------------------------------------------------------------------
def gin_reference(x, edge_index, batch, params, num_graphs, eps=0.0):
    n = x.shape[0]
    src, dst = edge_index[0], edge_index[1]
    adj = (jnp.zeros((n, n), jnp.float32).at[dst, src].add(1.0)
           + (1.0 + eps) * jnp.eye(n, dtype=jnp.float32))

    def gin(h, wa, ba, wb, bb):
        a = adj @ h
        a = jnp.maximum(a @ wa + ba, 0.0)
        return a @ wb + bb

    h = jnp.maximum(gin(x, params["w1a"], params["b1a"],
                        params["w1b"], params["b1b"]), 0.0)
    h = gin(h, params["w2a"], params["b2a"], params["w2b"], params["b2b"])
    onehot = (batch[None, :] == jnp.arange(num_graphs)[:, None]).astype(jnp.float32)
    pooled = (onehot / jnp.sum(onehot, axis=1, keepdims=True)) @ h
    logits = pooled @ params["wfc"] + params["bfc"]
    return jax.nn.log_softmax(logits, axis=1)


def init_params(key, in_channels, out_channels):
    """PyTorch Linear(in, out) stores weight [out, in]; we store the transposed
    [in, out] so the kernels compute x @ W + b directly."""
    ks = jax.random.split(key, 10)
    scale = 0.1
    return {
        # conv1 MLP: Linear(in, 64) -> ReLU -> Linear(64, 64)
        "w1a": scale * jax.random.normal(ks[0], (in_channels, 64), jnp.float32),
        "b1a": scale * jax.random.normal(ks[1], (1, 64), jnp.float32),
        "w1b": scale * jax.random.normal(ks[2], (64, 64), jnp.float32),
        "b1b": scale * jax.random.normal(ks[3], (1, 64), jnp.float32),
        # conv2 MLP: Linear(64, 64) -> ReLU -> Linear(64, 128)
        "w2a": scale * jax.random.normal(ks[4], (64, 64), jnp.float32),
        "b2a": scale * jax.random.normal(ks[5], (1, 64), jnp.float32),
        "w2b": scale * jax.random.normal(ks[6], (64, 128), jnp.float32),
        "b2b": scale * jax.random.normal(ks[7], (1, 128), jnp.float32),
        # fc: Linear(128, out_channels)
        "wfc": scale * jax.random.normal(ks[8], (128, out_channels), jnp.float32),
        "bfc": scale * jax.random.normal(ks[9], (1, out_channels), jnp.float32),
    }


if __name__ == "__main__":
    key = jax.random.PRNGKey(0)
    k_x, k_p = jax.random.split(key)

    # 2 graphs x 80 nodes (N=160 -> padded to 256), in_channels=4, 3 classes.
    num_graphs = 2
    per_graph = 80
    num_nodes = num_graphs * per_graph
    in_channels = 4
    out_channels = 3

    x = jax.random.normal(k_x, (num_nodes, in_channels), jnp.float32)

    # deterministic edges: a ring within each graph (both directions)
    src_list, dst_list = [], []
    for g in range(num_graphs):
        base = g * per_graph
        for i in range(per_graph):
            a = base + i
            b = base + (i + 1) % per_graph
            src_list += [a, b]
            dst_list += [b, a]
    edge_index = jnp.array([src_list, dst_list], dtype=jnp.int32)
    batch = jnp.repeat(jnp.arange(num_graphs, dtype=jnp.int32), per_graph)

    params = init_params(k_p, in_channels, out_channels)
    ref = gin_reference(x, edge_index, batch, params, num_graphs)

    # auto tiles (n_pad=256 -> tm=tk=256, 1x1 grid)
    out_auto = jax.block_until_ready(
        gin_forward(x, edge_index, batch, params, num_graphs))
    # forced 128 tiles (2x2 grid) to exercise the tiled reduction, the resident-
    # activation ds slicing, per-row-tile pool partials and the head reduction.
    out_tiled = jax.block_until_ready(
        gin_forward(x, edge_index, batch, params, num_graphs, tm=128, tk=128))

    for out in (out_auto, out_tiled):
        assert out.shape == (num_graphs, out_channels)
        # log_softmax rows should exponentiate-sum to 1
        assert jnp.allclose(jnp.sum(jnp.exp(out), axis=1), 1.0, atol=1e-4)
        # match the pure-JAX f32 reference (tolerance covers the bf16 activation path)
        assert jnp.allclose(out, ref, atol=5e-2), (out, ref)
    print("KERNEL_OK")
</pallas_src>

<mosaic_0001>
module attributes {stable_mosaic.version = 11 : i64} {
  func.func @_gin_layer1_kernel(%arg0: i32, %arg1: i32, %arg2: memref<256x256xi8, #tpu.memory_space<vmem>>, %arg3: memref<256x64xbf16, #tpu.memory_space<vmem>>, %arg4: memref<1x64xf32, #tpu.memory_space<vmem>>, %arg5: memref<64x64xf32, #tpu.memory_space<vmem>>, %arg6: memref<1x64xf32, #tpu.memory_space<vmem>>, %arg7: memref<256x64xbf16, #tpu.memory_space<vmem>>, %arg8: memref<256x64xf32, #tpu.memory_space<vmem>>) attributes {dimension_semantics = [#tpu.dimension_semantics<parallel>, #tpu.dimension_semantics<arbitrary>], iteration_bounds = array<i64: 1, 1>, scalar_prefetch = 0 : i64, scratch_operands = 1 : i64, tpu.core_type = #tpu.core_type<tc>, window_params = [{transform_indices = @transform_0, window_bounds = array<i64: 256, 256>}, {pipeline_mode = #tpu.pipeline_mode<synchronous>, transform_indices = @transform_1, window_bounds = array<i64: 256, 64>}, {pipeline_mode = #tpu.pipeline_mode<synchronous>, transform_indices = @transform_2, window_bounds = array<i64: 1, 64>}, {pipeline_mode = #tpu.pipeline_mode<synchronous>, transform_indices = @transform_3, window_bounds = array<i64: 64, 64>}, {pipeline_mode = #tpu.pipeline_mode<synchronous>, transform_indices = @transform_4, window_bounds = array<i64: 1, 64>}, {transform_indices = @transform_5, window_bounds = array<i64: 256, 64>}]} {
    %c0_i32 = arith.constant 0 : i32
    %0 = arith.cmpi eq, %arg1, %c0_i32 : i32
    %1 = arith.extui %0 : i1 to i32
    %c0_i32_0 = arith.constant 0 : i32
    %2 = arith.cmpi ne, %1, %c0_i32_0 : i32
    scf.if %2 {
      %c256_i32_9 = arith.constant 256 : i32
      %16 = arith.muli %arg0, %c256_i32_9 : i32
      %17 = tpu.assume_multiple %16, 256 : i32
      %18 = arith.index_cast %17 : i32 to index
      %c0_10 = arith.constant 0 : index
      %19 = vector.load %arg3[%18, %c0_10] : memref<256x64xbf16, #tpu.memory_space<vmem>>, vector<256x64xbf16>
      %20 = arith.extf %19 : vector<256x64xbf16> to vector<256x64xf32>
      %cst_11 = arith.constant 1.000000e+00 : f32
      %21 = vector.broadcast %cst_11 : f32 to vector<256x64xf32>
      %22 = arith.mulf %21, %20 : vector<256x64xf32>
      %c0_12 = arith.constant 0 : index
      %c0_13 = arith.constant 0 : index
      %23 = vector.load %arg8[%c0_12, %c0_13] : memref<256x64xf32, #tpu.memory_space<vmem>>, vector<256x64xf32>
      tpu.vector_store %arg8[%c0_12, %c0_13], %22 {strides = array<i32>} : memref<256x64xf32, #tpu.memory_space<vmem>>, vector<256x64xf32>,
    } else {
    }
    %c256_i32 = arith.constant 256 : i32
    %3 = arith.muli %arg1, %c256_i32 : i32
    %4 = tpu.assume_multiple %3, 256 : i32
    %c0 = arith.constant 0 : index
    %c0_1 = arith.constant 0 : index
    %5 = vector.load %arg8[%c0, %c0_1] : memref<256x64xf32, #tpu.memory_space<vmem>>, vector<256x64xf32>
    %c0_2 = arith.constant 0 : index
    %c0_3 = arith.constant 0 : index
    %6 = vector.load %arg2[%c0_2, %c0_3] : memref<256x256xi8, #tpu.memory_space<vmem>>, vector<256x256xi8>
    %7 = arith.sitofp %6 : vector<256x256xi8> to vector<256x256xbf16>
    %8 = arith.index_cast %4 : i32 to index
    %c0_4 = arith.constant 0 : index
    %9 = vector.load %arg3[%8, %c0_4] : memref<256x64xbf16, #tpu.memory_space<vmem>>, vector<256x64xbf16>
    %cst = arith.constant dense<0.000000e+00> : vector<256x64xf32>
    %10 = tpu.matmul %7, %9, %cst {dimension_numbers = #tpu.dot_dimension_numbers<[1], [0], [0], [1], [0, 0, 1, 1], [], []>} : vector<256x256xbf16>, vector<256x64xbf16>, vector<256x64xf32> -> vector<256x64xf32>
    %11 = arith.addf %5, %10 : vector<256x64xf32>
    %c0_5 = arith.constant 0 : index
    %c0_6 = arith.constant 0 : index
    %12 = vector.load %arg8[%c0_5, %c0_6] : memref<256x64xf32, #tpu.memory_space<vmem>>, vector<256x64xf32>
    tpu.vector_store %arg8[%c0_5, %c0_6], %11 {strides = array<i32>} : memref<256x64xf32, #tpu.memory_space<vmem>>, vector<256x64xf32>,
    %c0_i32_7 = arith.constant 0 : i32
    %13 = arith.cmpi eq, %arg1, %c0_i32_7 : i32
    %14 = arith.extui %13 : i1 to i32
    %c0_i32_8 = arith.constant 0 : i32
    %15 = arith.cmpi ne, %14, %c0_i32_8 : i32
    scf.if %15 {
      %c0_9 = arith.constant 0 : index
      %c0_10 = arith.constant 0 : index
      %16 = vector.load %arg8[%c0_9, %c0_10] : memref<256x64xf32, #tpu.memory_space<vmem>>, vector<256x64xf32>
      %c0_11 = arith.constant 0 : index
      %c0_12 = arith.constant 0 : index
      %17 = vector.load %arg4[%c0_11, %c0_12] : memref<1x64xf32, #tpu.memory_space<vmem>>, vector<1x64xf32>
      %18 = vector.broadcast %17 : vector<1x64xf32> to vector<256x64xf32>
      %19 = arith.addf %16, %18 : vector<256x64xf32>
      %cst_13 = arith.constant 0.000000e+00 : f32
      %20 = vector.broadcast %cst_13 : f32 to vector<256x64xf32>
      %21 = arith.maximumf %19, %20 : vector<256x64xf32>
      %c0_14 = arith.constant 0 : index
      %c0_15 = arith.constant 0 : index
      %22 = vector.load %arg5[%c0_14, %c0_15] : memref<64x64xf32, #tpu.memory_space<vmem>>, vector<64x64xf32>
      %cst_16 = arith.constant dense<0.000000e+00> : vector<256x64xf32>
      %23 = tpu.matmul %21, %22, %cst_16 {dimension_numbers = #tpu.dot_dimension_numbers<[1], [0], [0], [1], [0, 0, 1, 1], [], []>} : vector<256x64xf32>, vector<64x64xf32>, vector<256x64xf32> -> vector<256x64xf32>
      %c0_17 = arith.constant 0 : index
      %c0_18 = arith.constant 0 : index
      %24 = vector.load %arg6[%c0_17, %c0_18] : memref<1x64xf32, #tpu.memory_space<vmem>>, vector<1x64xf32>
      %25 = vector.broadcast %24 : vector<1x64xf32> to vector<256x64xf32>
      %26 = arith.addf %23, %25 : vector<256x64xf32>
      %cst_19 = arith.constant 0.000000e+00 : f32
      %27 = vector.broadcast %cst_19 : f32 to vector<256x64xf32>
      %28 = arith.maximumf %26, %27 : vector<256x64xf32>
      %29 = arith.truncf %28 : vector<256x64xf32> to vector<256x64xbf16>
      %c0_20 = arith.constant 0 : index
      %c0_21 = arith.constant 0 : index
      %30 = vector.load %arg7[%c0_20, %c0_21] : memref<256x64xbf16, #tpu.memory_space<vmem>>, vector<256x64xbf16>
      tpu.vector_store %arg7[%c0_20, %c0_21], %29 {strides = array<i32>} : memref<256x64xbf16, #tpu.memory_space<vmem>>, vector<256x64xbf16>,
    } else {
    }
    return
  }
  func.func @transform_0(%arg0: i32, %arg1: i32) -> (i32, i32) {
    %c0_i32 = arith.constant 0 : i32
    return %arg0, %arg1 : i32, i32
  }
  func.func @transform_1(%arg0: i32, %arg1: i32) -> (i32, i32) {
    %c0_i32 = arith.constant 0 : i32
    %c0_i32_0 = arith.constant 0 : i32
    %c0_i32_1 = arith.constant 0 : i32
    return %c0_i32, %c0_i32_0 : i32, i32
  }
  func.func @transform_2(%arg0: i32, %arg1: i32) -> (i32, i32) {
    %c0_i32 = arith.constant 0 : i32
    %c0_i32_0 = arith.constant 0 : i32
    %c0_i32_1 = arith.constant 0 : i32
    return %c0_i32, %c0_i32_0 : i32, i32
  }
  func.func @transform_3(%arg0: i32, %arg1: i32) -> (i32, i32) {
    %c0_i32 = arith.constant 0 : i32
    %c0_i32_0 = arith.constant 0 : i32
    %c0_i32_1 = arith.constant 0 : i32
    return %c0_i32, %c0_i32_0 : i32, i32
  }
  func.func @transform_4(%arg0: i32, %arg1: i32) -> (i32, i32) {
    %c0_i32 = arith.constant 0 : i32
    %c0_i32_0 = arith.constant 0 : i32
    %c0_i32_1 = arith.constant 0 : i32
    return %c0_i32, %c0_i32_0 : i32, i32
  }
  func.func @transform_5(%arg0: i32, %arg1: i32) -> (i32, i32) {
    %c0_i32 = arith.constant 0 : i32
    %c0_i32_0 = arith.constant 0 : i32
    return %arg0, %c0_i32 : i32, i32
  }
}

</mosaic_0001>

<llo_original>
// kernel: tpu_custom_call.1
$region0: #{tpu_custom_call.1}
  #allocation0 [shape = 'u32[]', space=smem, size = 0x4, offset = 0x4, fixed_abs, tag = 'smem constant byte address 0x4 - core index']
  #allocation1 [shape = 'u32[144,128]{1,0:T(1,128)}', space=vmem, size = 0x12000, scoped, tag = 'internal scratch']
  #allocation2 [shape = 'f32[256,64]{1,0:T(8,128)}', space=vmem, size = 0x20000, scoped, tag = 'scratch operand']
  %s0 = inlined_call_operand.vmem [shape: s8[256,256], index: 0, kind: input, shape index: {}]
  %s1 = inlined_call_operand.vmem [shape: bf16[256,64], index: 1, kind: input, shape index: {}]
  %s2 = inlined_call_operand.vmem [shape: f32[1,64], index: 2, kind: input, shape index: {}]
  %s3 = inlined_call_operand.vmem [shape: f32[64,64], index: 3, kind: input, shape index: {}]
  %s4 = inlined_call_operand.vmem [shape: f32[1,64], index: 4, kind: input, shape index: {}]
  %s5 = inlined_call_operand.vmem [shape: bf16[256,64], index: 5, kind: output, shape index: {}]
  %s6 = sld [smem:[#allocation0]]
  $region38: #{tpu_custom_call.1} parent=0
    _
  %s8 = ssub.s32 1, %s6
  %s9 = scalar_select 0, %s8, %s6
  // Predicated region
  $region2: #{tpu_custom_call.1} parent=0 // pred_check
    _
  $region3: #{tpu_custom_call.1} parent=0 // pred_check_branch
    %11 = sbr.rel (0) target = $region5
  $region4: #{tpu_custom_call.1} parent=0 // pred_region
    _
  $region5: #{tpu_custom_call.1} parent=0 // pred_fallthru
    _
  // Predicated region
  $region6: #{tpu_custom_call.1} parent=0 // pred_check
    _
  $region7: #{tpu_custom_call.1} parent=0 // pred_check_branch
    %13 = sbr.rel (0) target = $region9
  $region8: #{tpu_custom_call.1} parent=0 // pred_region
    _
  $region9: #{tpu_custom_call.1} parent=0 // pred_fallthru
    _
  // Predicated region
  $region10: #{tpu_custom_call.1} parent=0 // pred_check
    _
  $region11: #{tpu_custom_call.1} parent=0 // pred_check_branch
    %15 = sbr.rel (0) target = $region13
  $region12: #{tpu_custom_call.1} parent=0 // pred_region
    _
  $region13: #{tpu_custom_call.1} parent=0 // pred_fallthru
    _
  // Predicated region
  $region14: #{tpu_custom_call.1} parent=0 // pred_check
    _
  $region15: #{tpu_custom_call.1} parent=0 // pred_check_branch
    %17 = sbr.rel (0) target = $region17
  $region16: #{tpu_custom_call.1} parent=0 // pred_region
    _
  $region17: #{tpu_custom_call.1} parent=0 // pred_fallthru
    _
  // Predicated region
  $region18: #{tpu_custom_call.1} parent=0 // pred_check
    _
  $region19: #{tpu_custom_call.1} parent=0 // pred_check_branch
    %19 = sbr.rel (0) target = $region21
  $region20: #{tpu_custom_call.1} parent=0 // pred_region
    _
  $region21: #{tpu_custom_call.1} parent=0 // pred_fallthru
    _
  %p21 = scmp.eq.s32.totalorder 0, 0
  // Predicated region
  $region22: #{tpu_custom_call.1} parent=0 // pred_check
    %p22 = pneg %p21
  $region23: #{tpu_custom_call.1} parent=0 // pred_check_branch
    %24 = sbr.rel (%p22) target = $region25
  $region24: #{tpu_custom_call.1} parent=0 // pred_region
    %s25 = smul.u32 0, 256
    %s26 = sshra.s32 %s25, 3
    %s27 = sand.u32 %s25, 7
    %s28 = smul.addr %s26, 4
    %s29 = scalar_lea.vmem %s1, %s28
    %v30 = vld [vmem:[%s29] sm:$0xf]
    %v31 = vld [vmem:[%s29 + $0x4] sm:$0xf]
    %v32 = vld [vmem:[%s29 + $0x8] sm:$0xf]
    %v33 = vld [vmem:[%s29 + $0xc] sm:$0xf]
    %v34 = vld [vmem:[%s29 + $0x10] sm:$0xf]
    %v35 = vld [vmem:[%s29 + $0x14] sm:$0xf]
    %v36 = vld [vmem:[%s29 + $0x18] sm:$0xf]
    %v37 = vld [vmem:[%s29 + $0x1c] sm:$0xf]
    %v38 = vld [vmem:[%s29 + $0x20] sm:$0xf]
    %v39 = vld [vmem:[%s29 + $0x24] sm:$0xf]
    %v40 = vld [vmem:[%s29 + $0x28] sm:$0xf]
    %v41 = vld [vmem:[%s29 + $0x2c] sm:$0xf]
    %v42 = vld [vmem:[%s29 + $0x30] sm:$0xf]
    %v43 = vld [vmem:[%s29 + $0x34] sm:$0xf]
    %v44 = vld [vmem:[%s29 + $0x38] sm:$0xf]
    %v45 = vld [vmem:[%s29 + $0x3c] sm:$0xf]
    %v46 = vld [vmem:[%s29 + $0x40] sm:$0xf]
    %v47 = vld [vmem:[%s29 + $0x44] sm:$0xf]
    %v48 = vld [vmem:[%s29 + $0x48] sm:$0xf]
    %v49 = vld [vmem:[%s29 + $0x4c] sm:$0xf]
    %v50 = vld [vmem:[%s29 + $0x50] sm:$0xf]
    %v51 = vld [vmem:[%s29 + $0x54] sm:$0xf]
    %v52 = vld [vmem:[%s29 + $0x58] sm:$0xf]
    %v53 = vld [vmem:[%s29 + $0x5c] sm:$0xf]
    %v54 = vld [vmem:[%s29 + $0x60] sm:$0xf]
    %v55 = vld [vmem:[%s29 + $0x64] sm:$0xf]
    %v56 = vld [vmem:[%s29 + $0x68] sm:$0xf]
    %v57 = vld [vmem:[%s29 + $0x6c] sm:$0xf]
    %v58 = vld [vmem:[%s29 + $0x70] sm:$0xf]
    %v59 = vld [vmem:[%s29 + $0x74] sm:$0xf]
    %v60 = vld [vmem:[%s29 + $0x78] sm:$0xf]
    %v61 = vld [vmem:[%s29 + $0x7c] sm:$0xf]
    %v62 = vunpack.c.l.bf16 %v30
    %v63 = vunpack.c.l.bf16 %v31
    %v64 = vunpack.c.l.bf16 %v32
    %v65 = vunpack.c.l.bf16 %v33
    %v66 = vunpack.c.l.bf16 %v34
    %v67 = vunpack.c.l.bf16 %v35
    %v68 = vunpack.c.l.bf16 %v36
    %v69 = vunpack.c.l.bf16 %v37
    %v70 = vunpack.c.l.bf16 %v38
    %v71 = vunpack.c.l.bf16 %v39
    %v72 = vunpack.c.l.bf16 %v40
    %v73 = vunpack.c.l.bf16 %v41
    %v74 = vunpack.c.l.bf16 %v42
    %v75 = vunpack.c.l.bf16 %v43
    %v76 = vunpack.c.l.bf16 %v44
    %v77 = vunpack.c.l.bf16 %v45
    %v78 = vunpack.c.l.bf16 %v46
    %v79 = vunpack.c.l.bf16 %v47
    %v80 = vunpack.c.l.bf16 %v48
    %v81 = vunpack.c.l.bf16 %v49
    %v82 = vunpack.c.l.bf16 %v50
    %v83 = vunpack.c.l.bf16 %v51
    %v84 = vunpack.c.l.bf16 %v52
    %v85 = vunpack.c.l.bf16 %v53
    %v86 = vunpack.c.l.bf16 %v54
    %v87 = vunpack.c.l.bf16 %v55
    %v88 = vunpack.c.l.bf16 %v56
    %v89 = vunpack.c.l.bf16 %v57
    %v90 = vunpack.c.l.bf16 %v58
    %v91 = vunpack.c.l.bf16 %v59
    %v92 = vunpack.c.l.bf16 %v60
    %v93 = vunpack.c.l.bf16 %v61
    %vm94 = vcmask 523264
    %95 = vst.msk [vmem:[#allocation2] sm:$0xff] %vm94, %v62
    %96 = vst.msk [vmem:[#allocation2 + $0x8] sm:$0xff] %vm94, %v63
    %97 = vst.msk [vmem:[#allocation2 + $0x10] sm:$0xff] %vm94, %v64
    %98 = vst.msk [vmem:[#allocation2 + $0x18] sm:$0xff] %vm94, %v65
    %99 = vst.msk [vmem:[#allocation2 + $0x20] sm:$0xff] %vm94, %v66
    %100 = vst.msk [vmem:[#allocation2 + $0x28] sm:$0xff] %vm94, %v67
    %101 = vst.msk [vmem:[#allocation2 + $0x30] sm:$0xff] %vm94, %v68
    %102 = vst.msk [vmem:[#allocation2 + $0x38] sm:$0xff] %vm94, %v69
    %103 = vst.msk [vmem:[#allocation2 + $0x40] sm:$0xff] %vm94, %v70
    %104 = vst.msk [vmem:[#allocation2 + $0x48] sm:$0xff] %vm94, %v71
    %105 = vst.msk [vmem:[#allocation2 + $0x50] sm:$0xff] %vm94, %v72
    %106 = vst.msk [vmem:[#allocation2 + $0x58] sm:$0xff] %vm94, %v73
    %107 = vst.msk [vmem:[#allocation2 + $0x60] sm:$0xff] %vm94, %v74
    %108 = vst.msk [vmem:[#allocation2 + $0x68] sm:$0xff] %vm94, %v75
    %109 = vst.msk [vmem:[#allocation2 + $0x70] sm:$0xff] %vm94, %v76
    %110 = vst.msk [vmem:[#allocation2 + $0x78] sm:$0xff] %vm94, %v77
    %111 = vst.msk [vmem:[#allocation2 + $0x80] sm:$0xff] %vm94, %v78
    %112 = vst.msk [vmem:[#allocation2 + $0x88] sm:$0xff] %vm94, %v79
    %113 = vst.msk [vmem:[#allocation2 + $0x90] sm:$0xff] %vm94, %v80
    %114 = vst.msk [vmem:[#allocation2 + $0x98] sm:$0xff] %vm94, %v81
    %115 = vst.msk [vmem:[#allocation2 + $0xa0] sm:$0xff] %vm94, %v82
    %116 = vst.msk [vmem:[#allocation2 + $0xa8] sm:$0xff] %vm94, %v83
    %117 = vst.msk [vmem:[#allocation2 + $0xb0] sm:$0xff] %vm94, %v84
    %118 = vst.msk [vmem:[#allocation2 + $0xb8] sm:$0xff] %vm94, %v85
    %119 = vst.msk [vmem:[#allocation2 + $0xc0] sm:$0xff] %vm94, %v86
    %120 = vst.msk [vmem:[#allocation2 + $0xc8] sm:$0xff] %vm94, %v87
    %121 = vst.msk [vmem:[#allocation2 + $0xd0] sm:$0xff] %vm94, %v88
    %122 = vst.msk [vmem:[#allocation2 + $0xd8] sm:$0xff] %vm94, %v89
    %123 = vst.msk [vmem:[#allocation2 + $0xe0] sm:$0xff] %vm94, %v90
    %124 = vst.msk [vmem:[#allocation2 + $0xe8] sm:$0xff] %vm94, %v91
    %125 = vst.msk [vmem:[#allocation2 + $0xf0] sm:$0xff] %vm94, %v92
    %126 = vst.msk [vmem:[#allocation2 + $0xf8] sm:$0xff] %vm94, %v93
  $region25: #{tpu_custom_call.1} parent=0 // pred_fallthru
    _
  %s127 = smul.u32 0, 256
  %v128 = vld [vmem:[#allocation2] sm:$0xff]
  %v129 = vld [vmem:[#allocation2 + $0x8] sm:$0xff]
  %v130 = vld [vmem:[#allocation2 + $0x10] sm:$0xff]
  %v131 = vld [vmem:[#allocation2 + $0x18] sm:$0xff]
  %v132 = vld [vmem:[#allocation2 + $0x20] sm:$0xff]
  %v133 = vld [vmem:[#allocation2 + $0x28] sm:$0xff]
  %v134 = vld [vmem:[#allocation2 + $0x30] sm:$0xff]
  %v135 = vld [vmem:[#allocation2 + $0x38] sm:$0xff]
  %v136 = vld [vmem:[#allocation2 + $0x40] sm:$0xff]
  %v137 = vld [vmem:[#allocation2 + $0x48] sm:$0xff]
  %v138 = vld [vmem:[#allocation2 + $0x50] sm:$0xff]
  %v139 = vld [vmem:[#allocation2 + $0x58] sm:$0xff]
  %v140 = vld [vmem:[#allocation2 + $0x60] sm:$0xff]
  %v141 = vld [vmem:[#allocation2 + $0x68] sm:$0xff]
  %v142 = vld [vmem:[#allocation2 + $0x70] sm:$0xff]
  %v143 = vld [vmem:[#allocation2 + $0x78] sm:$0xff]
  %v144 = vld [vmem:[#allocation2 + $0x80] sm:$0xff]
  %v145 = vld [vmem:[#allocation2 + $0x88] sm:$0xff]
  %v146 = vld [vmem:[#allocation2 + $0x90] sm:$0xff]
  %v147 = vld [vmem:[#allocation2 + $0x98] sm:$0xff]
  %v148 = vld [vmem:[#allocation2 + $0xa0] sm:$0xff]
  %v149 = vld [vmem:[#allocation2 + $0xa8] sm:$0xff]
  %v150 = vld [vmem:[#allocation2 + $0xb0] sm:$0xff]
  %v151 = vld [vmem:[#allocation2 + $0xb8] sm:$0xff]
  %v152 = vld [vmem:[#allocation2 + $0xc0] sm:$0xff]
  %v153 = vld [vmem:[#allocation2 + $0xc8] sm:$0xff]
  %v154 = vld [vmem:[#allocation2 + $0xd0] sm:$0xff]
  %v155 = vld [vmem:[#allocation2 + $0xd8] sm:$0xff]
  %v156 = vld [vmem:[#allocation2 + $0xe0] sm:$0xff]
  %v157 = vld [vmem:[#allocation2 + $0xe8] sm:$0xff]
  %v158 = vld [vmem:[#allocation2 + $0xf0] sm:$0xff]
  %v159 = vld [vmem:[#allocation2 + $0xf8] sm:$0xff]
  %v160 = vld [vmem:[%s0] sm:$0xff]
  %v161 = vld [vmem:[%s0 + $0x8] sm:$0xff]
  %v162 = vld [vmem:[%s0 + $0x10] sm:$0xff]
  %v163 = vld [vmem:[%s0 + $0x18] sm:$0xff]
  %v164 = vld [vmem:[%s0 + $0x20] sm:$0xff]
  %v165 = vld [vmem:[%s0 + $0x28] sm:$0xff]
  %v166 = vld [vmem:[%s0 + $0x30] sm:$0xff]
  %v167 = vld [vmem:[%s0 + $0x38] sm:$0xff]
  %v168 = vld [vmem:[%s0 + $0x40] sm:$0xff]
  %v169 = vld [vmem:[%s0 + $0x48] sm:$0xff]
  %v170 = vld [vmem:[%s0 + $0x50] sm:$0xff]
  %v171 = vld [vmem:[%s0 + $0x58] sm:$0xff]
  %v172 = vld [vmem:[%s0 + $0x60] sm:$0xff]
  %v173 = vld [vmem:[%s0 + $0x68] sm:$0xff]
  %v174 = vld [vmem:[%s0 + $0x70] sm:$0xff]
  %v175 = vld [vmem:[%s0 + $0x78] sm:$0xff]
  %v176 = vunpack.c.l.s8.bf16 %v160
  %v177 = vunpack.c.l.s8.bf16 %v161
  %v178 = vunpack.c.h.s8.bf16 %v160
  %v179 = vunpack.c.h.s8.bf16 %v161
  %v180 = vunpack.c.l.s8.bf16 %v162
  %v181 = vunpack.c.l.s8.bf16 %v163
  %v182 = vunpack.c.h.s8.bf16 %v162
  %v183 = vunpack.c.h.s8.bf16 %v163
  %v184 = vunpack.c.l.s8.bf16 %v164
  %v185 = vunpack.c.l.s8.bf16 %v165
  %v186 = vunpack.c.h.s8.bf16 %v164
  %v187 = vunpack.c.h.s8.bf16 %v165
  %v188 = vunpack.c.l.s8.bf16 %v166
  %v189 = vunpack.c.l.s8.bf16 %v167
  %v190 = vunpack.c.h.s8.bf16 %v166
  %v191 = vunpack.c.h.s8.bf16 %v167
  %v192 = vunpack.c.l.s8.bf16 %v168
  %v193 = vunpack.c.l.s8.bf16 %v169
  %v194 = vunpack.c.h.s8.bf16 %v168
  %v195 = vunpack.c.h.s8.bf16 %v169
  %v196 = vunpack.c.l.s8.bf16 %v170
  %v197 = vunpack.c.l.s8.bf16 %v171
  %v198 = vunpack.c.h.s8.bf16 %v170
  %v199 = vunpack.c.h.s8.bf16 %v171
  %v200 = vunpack.c.l.s8.bf16 %v172
  %v201 = vunpack.c.l.s8.bf16 %v173
  %v202 = vunpack.c.h.s8.bf16 %v172
  %v203 = vunpack.c.h.s8.bf16 %v173
  %v204 = vunpack.c.l.s8.bf16 %v174
  %v205 = vunpack.c.l.s8.bf16 %v175
  %v206 = vunpack.c.h.s8.bf16 %v174
  %v207 = vunpack.c.h.s8.bf16 %v175
  %s208 = sshra.s32 %s127, 3
  %s209 = sand.u32 %s127, 7
  %s210 = smul.addr %s208, 4
  %s211 = scalar_lea.vmem %s1, %s210
  %v212 = vld [vmem:[%s211] sm:$0xf]
  %v213 = vld [vmem:[%s211 + $0x4] sm:$0xf]
  %v214 = vld [vmem:[%s211 + $0x8] sm:$0xf]
  %v215 = vld [vmem:[%s211 + $0xc] sm:$0xf]
  %v216 = vld [vmem:[%s211 + $0x10] sm:$0xf]
  %v217 = vld [vmem:[%s211 + $0x14] sm:$0xf]
  %v218 = vld [vmem:[%s211 + $0x18] sm:$0xf]
  %v219 = vld [vmem:[%s211 + $0x1c] sm:$0xf]
  %v220 = vld [vmem:[%s211 + $0x20] sm:$0xf]
  %v221 = vld [vmem:[%s211 + $0x24] sm:$0xf]
  %v222 = vld [vmem:[%s211 + $0x28] sm:$0xf]
  %v223 = vld [vmem:[%s211 + $0x2c] sm:$0xf]
  %v224 = vld [vmem:[%s211 + $0x30] sm:$0xf]
  %v225 = vld [vmem:[%s211 + $0x34] sm:$0xf]
  %v226 = vld [vmem:[%s211 + $0x38] sm:$0xf]
  %v227 = vld [vmem:[%s211 + $0x3c] sm:$0xf]
  %v228 = vld [vmem:[%s211 + $0x40] sm:$0xf]
  %v229 = vld [vmem:[%s211 + $0x44] sm:$0xf]
  %v230 = vld [vmem:[%s211 + $0x48] sm:$0xf]
  %v231 = vld [vmem:[%s211 + $0x4c] sm:$0xf]
  %v232 = vld [vmem:[%s211 + $0x50] sm:$0xf]
  %v233 = vld [vmem:[%s211 + $0x54] sm:$0xf]
  %v234 = vld [vmem:[%s211 + $0x58] sm:$0xf]
  %v235 = vld [vmem:[%s211 + $0x5c] sm:$0xf]
  %v236 = vld [vmem:[%s211 + $0x60] sm:$0xf]
  %v237 = vld [vmem:[%s211 + $0x64] sm:$0xf]
  %v238 = vld [vmem:[%s211 + $0x68] sm:$0xf]
  %v239 = vld [vmem:[%s211 + $0x6c] sm:$0xf]
  %v240 = vld [vmem:[%s211 + $0x70] sm:$0xf]
  %v241 = vld [vmem:[%s211 + $0x74] sm:$0xf]
  %v242 = vld [vmem:[%s211 + $0x78] sm:$0xf]
  %v243 = vld [vmem:[%s211 + $0x7c] sm:$0xf]
  %v276 = vunpack.c.l.b16 %v212
  %v277 = vunpack.c.l.b16 %v213
  %v278 = vunpack.c.l.b16 %v214
  %v279 = vunpack.c.l.b16 %v215
  %v280 = vunpack.c.l.b16 %v216
  %v281 = vunpack.c.l.b16 %v217
  %v282 = vunpack.c.l.b16 %v218
  %v283 = vunpack.c.l.b16 %v219
  %v284 = vunpack.c.l.b16 %v220
  %v285 = vunpack.c.l.b16 %v221
  %v286 = vunpack.c.l.b16 %v222
  %v287 = vunpack.c.l.b16 %v223
  %v288 = vunpack.c.l.b16 %v224
  %v289 = vunpack.c.l.b16 %v225
  %v290 = vunpack.c.l.b16 %v226
  %v291 = vunpack.c.l.b16 %v227
  %v292 = vunpack.c.l.b16 %v228
  %v293 = vunpack.c.l.b16 %v229
  %v294 = vunpack.c.l.b16 %v230
  %v295 = vunpack.c.l.b16 %v231
  %v296 = vunpack.c.l.b16 %v232
  %v297 = vunpack.c.l.b16 %v233
  %v298 = vunpack.c.l.b16 %v234
  %v299 = vunpack.c.l.b16 %v235
  %v300 = vunpack.c.l.b16 %v236
  %v301 = vunpack.c.l.b16 %v237
  %v302 = vunpack.c.l.b16 %v238
  %v303 = vunpack.c.l.b16 %v239
  %v304 = vunpack.c.l.b16 %v240
  %v305 = vunpack.c.l.b16 %v241
  %v306 = vunpack.c.l.b16 %v242
  %v307 = vunpack.c.l.b16 %v243
  %v308 = vpack.c.b16 %v277, %v276
  %v309 = vpack.c.b16 %v279, %v278
  %v310 = vpack.c.b16 %v281, %v280
  %v311 = vpack.c.b16 %v283, %v282
  %v312 = vpack.c.b16 %v285, %v284
  %v313 = vpack.c.b16 %v287, %v286
  %v314 = vpack.c.b16 %v289, %v288
  %v315 = vpack.c.b16 %v291, %v290
  %v316 = vpack.c.b16 %v293, %v292
  %v317 = vpack.c.b16 %v295, %v294
  %v318 = vpack.c.b16 %v297, %v296
  %v319 = vpack.c.b16 %v299, %v298
  %v320 = vpack.c.b16 %v301, %v300
  %v321 = vpack.c.b16 %v303, %v302
  %v322 = vpack.c.b16 %v305, %v304
  %v323 = vpack.c.b16 %v307, %v306
  %340 = vmatprep.subr.bf16.mxu0 0
  %341 = vmatpush1.bf16.msra.mxu0 %v308
  %342 = vmatprep.subr.bf16.mxu0 0
  %343 = vmatpush1.bf16.msra.mxu0 %v309
  %344 = vmatprep.subr.bf16.mxu0 0
  %345 = vmatpush1.bf16.msra.mxu0 %v310
  %346 = vmatprep.subr.bf16.mxu0 0
  %347 = vmatpush1.bf16.msra.mxu0 %v311
  %348 = vmatprep.subr.bf16.mxu0 0
  %349 = vmatpush1.bf16.msra.mxu0 %v312
  %350 = vmatprep.subr.bf16.mxu0 0
  %351 = vmatpush1.bf16.msra.mxu0 %v313
  %352 = vmatprep.subr.bf16.mxu0 0
  %353 = vmatpush1.bf16.msra.mxu0 %v314
  %354 = vmatprep.subr.bf16.mxu0 0
  %355 = vmatpush1.bf16.msra.mxu0 %v315
  %356 = vmatprep.subr.bf16.mxu0 0
  %357 = vmatpush1.bf16.msra.mxu0 %v316
  %358 = vmatprep.subr.bf16.mxu0 0
  %359 = vmatpush1.bf16.msra.mxu0 %v317
  %360 = vmatprep.subr.bf16.mxu0 0
  %361 = vmatpush1.bf16.msra.mxu0 %v318
  %362 = vmatprep.subr.bf16.mxu0 0
  %363 = vmatpush1.bf16.msra.mxu0 %v319
  %364 = vmatprep.subr.bf16.mxu0 0
  %365 = vmatpush1.bf16.msra.mxu0 %v320
  %366 = vmatprep.subr.bf16.mxu0 0
  %367 = vmatpush1.bf16.msra.mxu0 %v321
  %368 = vmatprep.subr.bf16.mxu0 0
  %369 = vmatpush1.bf16.msra.mxu0 %v322
  %370 = vmatprep.subr.bf16.mxu0 0
  %371 = vmatpush1.bf16.msra.mxu0 %v323
  %372 = vmatprep.mubr.bf16.mxu0 %v177
  %373 = vmatmul.mubr.bf16.gmra.mrb[0].mxu0 %v176
  %v374 = vpop.f32.mrb[0].mxu0
  %v375 = vadd.f32 0.0, %v374
  %v376 = vpop.f32.mrb[0].mxu0
  %v377 = vpop.f32.mrb[0].mxu0
  %v378 = vadd.f32 0.0, %v377
  %v379 = vpop.f32.mrb[0].mxu0
  %380 = vmatprep.mubr.bf16.mxu0 %v179
  %381 = vmatmul.mubr.bf16.gmra.mrb[0].mxu0 %v178
  %v382 = vpop.f32.mrb[0].mxu0
  %v383 = vadd.f32 0.0, %v382
  %v384 = vpop.f32.mrb[0].mxu0
  %v385 = vpop.f32.mrb[0].mxu0
  %v386 = vadd.f32 0.0, %v385
  %v387 = vpop.f32.mrb[0].mxu0
  %388 = vmatprep.mubr.bf16.mxu0 %v181
  %389 = vmatmul.mubr.bf16.gmra.mrb[0].mxu0 %v180
  %v390 = vpop.f32.mrb[0].mxu0
  %v391 = vadd.f32 0.0, %v390
  %v392 = vpop.f32.mrb[0].mxu0
  %v393 = vpop.f32.mrb[0].mxu0
  %v394 = vadd.f32 0.0, %v393
  %v395 = vpop.f32.mrb[0].mxu0
  %396 = vmatprep.mubr.bf16.mxu0 %v183
  %397 = vmatmul.mubr.bf16.gmra.mrb[0].mxu0 %v182
  %v398 = vpop.f32.mrb[0].mxu0
  %v399 = vadd.f32 0.0, %v398
  %v400 = vpop.f32.mrb[0].mxu0
  %v401 = vpop.f32.mrb[0].mxu0
  %v402 = vadd.f32 0.0, %v401
  %v403 = vpop.f32.mrb[0].mxu0
  %404 = vmatprep.mubr.bf16.mxu0 %v185
  %405 = vmatmul.mubr.bf16.gmra.mrb[0].mxu0 %v184
  %v406 = vpop.f32.mrb[0].mxu0
  %v407 = vadd.f32 0.0, %v406
  %v408 = vpop.f32.mrb[0].mxu0
  %v409 = vpop.f32.mrb[0].mxu0
  %v410 = vadd.f32 0.0, %v409
  %v411 = vpop.f32.mrb[0].mxu0
  %412 = vmatprep.mubr.bf16.mxu0 %v187
  %413 = vmatmul.mubr.bf16.gmra.mrb[0].mxu0 %v186
  %v414 = vpop.f32.mrb[0].mxu0
  %v415 = vadd.f32 0.0, %v414
  %v416 = vpop.f32.mrb[0].mxu0
  %v417 = vpop.f32.mrb[0].mxu0
  %v418 = vadd.f32 0.0, %v417
  %v419 = vpop.f32.mrb[0].mxu0
  %420 = vmatprep.mubr.bf16.mxu0 %v189
  %421 = vmatmul.mubr.bf16.gmra.mrb[0].mxu0 %v188
  %v422 = vpop.f32.mrb[0].mxu0
  %v423 = vadd.f32 0.0, %v422
  %v424 = vpop.f32.mrb[0].mxu0
  %v425 = vpop.f32.mrb[0].mxu0
  %v426 = vadd.f32 0.0, %v425
  %v427 = vpop.f32.mrb[0].mxu0
  %428 = vmatprep.mubr.bf16.mxu0 %v191
  %429 = vmatmul.mubr.bf16.gmra.mrb[0].mxu0 %v190
  %v430 = vpop.f32.mrb[0].mxu0
  %v431 = vadd.f32 0.0, %v430
  %v432 = vpop.f32.mrb[0].mxu0
  %v433 = vpop.f32.mrb[0].mxu0
  %v434 = vadd.f32 0.0, %v433
  %v435 = vpop.f32.mrb[0].mxu0
  %436 = vmatprep.mubr.bf16.mxu0 %v193
  %437 = vmatmul.mubr.bf16.gmra.mrb[0].mxu0 %v192
  %v438 = vpop.f32.mrb[0].mxu0
  %v439 = vadd.f32 0.0, %v438
  %v440 = vpop.f32.mrb[0].mxu0
  %v441 = vpop.f32.mrb[0].mxu0
  %v442 = vadd.f32 0.0, %v441
  %v443 = vpop.f32.mrb[0].mxu0
  %444 = vmatprep.mubr.bf16.mxu0 %v195
  %445 = vmatmul.mubr.bf16.gmra.mrb[0].mxu0 %v194
  %v446 = vpop.f32.mrb[0].mxu0
  %v447 = vadd.f32 0.0, %v446
  %v448 = vpop.f32.mrb[0].mxu0
  %v449 = vpop.f32.mrb[0].mxu0
  %v450 = vadd.f32 0.0, %v449
  %v451 = vpop.f32.mrb[0].mxu0
  %452 = vmatprep.mubr.bf16.mxu0 %v197
  %453 = vmatmul.mubr.bf16.gmra.mrb[0].mxu0 %v196
  %v454 = vpop.f32.mrb[0].mxu0
  %v455 = vadd.f32 0.0, %v454
  %v456 = vpop.f32.mrb[0].mxu0
  %v457 = vpop.f32.mrb[0].mxu0
  %v458 = vadd.f32 0.0, %v457
  %v459 = vpop.f32.mrb[0].mxu0
  %460 = vmatprep.mubr.bf16.mxu0 %v199
  %461 = vmatmul.mubr.bf16.gmra.mrb[0].mxu0 %v198
  %v462 = vpop.f32.mrb[0].mxu0
  %v463 = vadd.f32 0.0, %v462
  %v464 = vpop.f32.mrb[0].mxu0
  %v465 = vpop.f32.mrb[0].mxu0
  %v466 = vadd.f32 0.0, %v465
  %v467 = vpop.f32.mrb[0].mxu0
  %468 = vmatprep.mubr.bf16.mxu0 %v201
  %469 = vmatmul.mubr.bf16.gmra.mrb[0].mxu0 %v200
  %v470 = vpop.f32.mrb[0].mxu0
  %v471 = vadd.f32 0.0, %v470
  %v472 = vpop.f32.mrb[0].mxu0
  %v473 = vpop.f32.mrb[0].mxu0
  %v474 = vadd.f32 0.0, %v473
  %v475 = vpop.f32.mrb[0].mxu0
  %476 = vmatprep.mubr.bf16.mxu0 %v203
  %477 = vmatmul.mubr.bf16.gmra.mrb[0].mxu0 %v202
  %v478 = vpop.f32.mrb[0].mxu0
  %v479 = vadd.f32 0.0, %v478
  %v480 = vpop.f32.mrb[0].mxu0
  %v481 = vpop.f32.mrb[0].mxu0
  %v482 = vadd.f32 0.0, %v481
  %v483 = vpop.f32.mrb[0].mxu0
  %484 = vmatprep.mubr.bf16.mxu0 %v205
  %485 = vmatmul.mubr.bf16.gmra.mrb[0].mxu0 %v204
  %v486 = vpop.f32.mrb[0].mxu0
  %v487 = vadd.f32 0.0, %v486
  %v488 = vpop.f32.mrb[0].mxu0
  %v489 = vpop.f32.mrb[0].mxu0
  %v490 = vadd.f32 0.0, %v489
  %v491 = vpop.f32.mrb[0].mxu0
  %492 = vmatprep.mubr.bf16.mxu0 %v207
  %493 = vmatmul.mubr.bf16.gmra.mrb[0].mxu0 %v206
  %v494 = vpop.f32.mrb[0].mxu0
  %v495 = vadd.f32 0.0, %v494
  %v496 = vpop.f32.mrb[0].mxu0
  %v497 = vpop.f32.mrb[0].mxu0
  %v498 = vadd.f32 0.0, %v497
  %v499 = vpop.f32.mrb[0].mxu0
  %500 = vdwg.mxu0
  %v501 = vadd.f32 %v128, %v375
  %v502 = vadd.f32 %v129, %v378
  %v503 = vadd.f32 %v130, %v383
  %v504 = vadd.f32 %v131, %v386
  %v505 = vadd.f32 %v132, %v391
  %v506 = vadd.f32 %v133, %v394
  %v507 = vadd.f32 %v134, %v399
  %v508 = vadd.f32 %v135, %v402
  %v509 = vadd.f32 %v136, %v407
  %v510 = vadd.f32 %v137, %v410
  %v511 = vadd.f32 %v138, %v415
  %v512 = vadd.f32 %v139, %v418
  %v513 = vadd.f32 %v140, %v423
  %v514 = vadd.f32 %v141, %v426
  %v515 = vadd.f32 %v142, %v431
  %v516 = vadd.f32 %v143, %v434
  %v517 = vadd.f32 %v144, %v439
  %v518 = vadd.f32 %v145, %v442
  %v519 = vadd.f32 %v146, %v447
  %v520 = vadd.f32 %v147, %v450
  %v521 = vadd.f32 %v148, %v455
  %v522 = vadd.f32 %v149, %v458
  %v523 = vadd.f32 %v150, %v463
  %v524 = vadd.f32 %v151, %v466
  %v525 = vadd.f32 %v152, %v471
  %v526 = vadd.f32 %v153, %v474
  %v527 = vadd.f32 %v154, %v479
  %v528 = vadd.f32 %v155, %v482
  %v529 = vadd.f32 %v156, %v487
  %v530 = vadd.f32 %v157, %v490
  %v531 = vadd.f32 %v158, %v495
  %v532 = vadd.f32 %v159, %v498
  %vm533 = vcmask 523264
  %534 = vst.msk [vmem:[#allocation2] sm:$0xff] %vm533, %v501
  %535 = vst.msk [vmem:[#allocation2 + $0x8] sm:$0xff] %vm533, %v502
  %536 = vst.msk [vmem:[#allocation2 + $0x10] sm:$0xff] %vm533, %v503
  %537 = vst.msk [vmem:[#allocation2 + $0x18] sm:$0xff] %vm533, %v504
  %538 = vst.msk [vmem:[#allocation2 + $0x20] sm:$0xff] %vm533, %v505
  %539 = vst.msk [vmem:[#allocation2 + $0x28] sm:$0xff] %vm533, %v506
  %540 = vst.msk [vmem:[#allocation2 + $0x30] sm:$0xff] %vm533, %v507
  %541 = vst.msk [vmem:[#allocation2 + $0x38] sm:$0xff] %vm533, %v508
  %542 = vst.msk [vmem:[#allocation2 + $0x40] sm:$0xff] %vm533, %v509
  %543 = vst.msk [vmem:[#allocation2 + $0x48] sm:$0xff] %vm533, %v510
  %544 = vst.msk [vmem:[#allocation2 + $0x50] sm:$0xff] %vm533, %v511
  %545 = vst.msk [vmem:[#allocation2 + $0x58] sm:$0xff] %vm533, %v512
  %546 = vst.msk [vmem:[#allocation2 + $0x60] sm:$0xff] %vm533, %v513
  %547 = vst.msk [vmem:[#allocation2 + $0x68] sm:$0xff] %vm533, %v514
  %548 = vst.msk [vmem:[#allocation2 + $0x70] sm:$0xff] %vm533, %v515
  %549 = vst.msk [vmem:[#allocation2 + $0x78] sm:$0xff] %vm533, %v516
  %550 = vst.msk [vmem:[#allocation2 + $0x80] sm:$0xff] %vm533, %v517
  %551 = vst.msk [vmem:[#allocation2 + $0x88] sm:$0xff] %vm533, %v518
  %552 = vst.msk [vmem:[#allocation2 + $0x90] sm:$0xff] %vm533, %v519
  %553 = vst.msk [vmem:[#allocation2 + $0x98] sm:$0xff] %vm533, %v520
  %554 = vst.msk [vmem:[#allocation2 + $0xa0] sm:$0xff] %vm533, %v521
  %555 = vst.msk [vmem:[#allocation2 + $0xa8] sm:$0xff] %vm533, %v522
  %556 = vst.msk [vmem:[#allocation2 + $0xb0] sm:$0xff] %vm533, %v523
  %557 = vst.msk [vmem:[#allocation2 + $0xb8] sm:$0xff] %vm533, %v524
  %558 = vst.msk [vmem:[#allocation2 + $0xc0] sm:$0xff] %vm533, %v525
  %559 = vst.msk [vmem:[#allocation2 + $0xc8] sm:$0xff] %vm533, %v526
  %560 = vst.msk [vmem:[#allocation2 + $0xd0] sm:$0xff] %vm533, %v527
  %561 = vst.msk [vmem:[#allocation2 + $0xd8] sm:$0xff] %vm533, %v528
  %562 = vst.msk [vmem:[#allocation2 + $0xe0] sm:$0xff] %vm533, %v529
  %563 = vst.msk [vmem:[#allocation2 + $0xe8] sm:$0xff] %vm533, %v530
  %564 = vst.msk [vmem:[#allocation2 + $0xf0] sm:$0xff] %vm533, %v531
  %565 = vst.msk [vmem:[#allocation2 + $0xf8] sm:$0xff] %vm533, %v532
  // Predicated region
  $region26: #{tpu_custom_call.1} parent=0 // pred_check
    %p566 = pneg %p21
  $region27: #{tpu_custom_call.1} parent=0 // pred_check_branch
    %568 = sbr.rel (%p566) target = $region29
  $region28: #{tpu_custom_call.1} parent=0 // pred_region
    %v569 = vld [vmem:[#allocation2] sm:$0xff]
    %v570 = vld [vmem:[#allocation2 + $0x8] sm:$0xff]
    %v571 = vld [vmem:[#allocation2 + $0x10] sm:$0xff]
    %v572 = vld [vmem:[#allocation2 + $0x18] sm:$0xff]
    %v573 = vld [vmem:[#allocation2 + $0x20] sm:$0xff]
    %v574 = vld [vmem:[#allocation2 + $0x28] sm:$0xff]
    %v575 = vld [vmem:[#allocation2 + $0x30] sm:$0xff]
    %v576 = vld [vmem:[#allocation2 + $0x38] sm:$0xff]
    %v577 = vld [vmem:[#allocation2 + $0x40] sm:$0xff]
    %v578 = vld [vmem:[#allocation2 + $0x48] sm:$0xff]
    %v579 = vld [vmem:[#allocation2 + $0x50] sm:$0xff]
    %v580 = vld [vmem:[#allocation2 + $0x58] sm:$0xff]
    %v581 = vld [vmem:[#allocation2 + $0x60] sm:$0xff]
    %v582 = vld [vmem:[#allocation2 + $0x68] sm:$0xff]
    %v583 = vld [vmem:[#allocation2 + $0x70] sm:$0xff]
    %v584 = vld [vmem:[#allocation2 + $0x78] sm:$0xff]
    %v585 = vld [vmem:[#allocation2 + $0x80] sm:$0xff]
    %v586 = vld [vmem:[#allocation2 + $0x88] sm:$0xff]
    %v587 = vld [vmem:[#allocation2 + $0x90] sm:$0xff]
    %v588 = vld [vmem:[#allocation2 + $0x98] sm:$0xff]
    %v589 = vld [vmem:[#allocation2 + $0xa0] sm:$0xff]
    %v590 = vld [vmem:[#allocation2 + $0xa8] sm:$0xff]
    %v591 = vld [vmem:[#allocation2 + $0xb0] sm:$0xff]
    %v592 = vld [vmem:[#allocation2 + $0xb8] sm:$0xff]
    %v593 = vld [vmem:[#allocation2 + $0xc0] sm:$0xff]
    %v594 = vld [vmem:[#allocation2 + $0xc8] sm:$0xff]
    %v595 = vld [vmem:[#allocation2 + $0xd0] sm:$0xff]
    %v596 = vld [vmem:[#allocation2 + $0xd8] sm:$0xff]
    %v597 = vld [vmem:[#allocation2 + $0xe0] sm:$0xff]
    %v598 = vld [vmem:[#allocation2 + $0xe8] sm:$0xff]
    %v599 = vld [vmem:[#allocation2 + $0xf0] sm:$0xff]
    %v600 = vld [vmem:[#allocation2 + $0xf8] sm:$0xff]
    %v601 = vld [vmem:[%s2] sm:$0x1]
    %v603 = vlaneseq
    %v604 = vshrl.u32 %v603, 7
    %v605 = vsub.s32 0, %v604
    %v606 = vrot.slane %v601, %v605
    %v608 = vadd.f32 %v569, %v606
    %v609 = vadd.f32 %v570, %v606
    %v610 = vadd.f32 %v571, %v606
    %v611 = vadd.f32 %v572, %v606
    %v612 = vadd.f32 %v573, %v606
    %v613 = vadd.f32 %v574, %v606
    %v614 = vadd.f32 %v575, %v606
    %v615 = vadd.f32 %v576, %v606
    %v616 = vadd.f32 %v577, %v606
    %v617 = vadd.f32 %v578, %v606
    %v618 = vadd.f32 %v579, %v606
    %v619 = vadd.f32 %v580, %v606
    %v620 = vadd.f32 %v581, %v606
    %v621 = vadd.f32 %v582, %v606
    %v622 = vadd.f32 %v583, %v606
    %v623 = vadd.f32 %v584, %v606
    %v624 = vadd.f32 %v585, %v606
    %v625 = vadd.f32 %v586, %v606
    %v626 = vadd.f32 %v587, %v606
    %v627 = vadd.f32 %v588, %v606
    %v628 = vadd.f32 %v589, %v606
    %v629 = vadd.f32 %v590, %v606
    %v630 = vadd.f32 %v591, %v606
    %v631 = vadd.f32 %v592, %v606
    %v632 = vadd.f32 %v593, %v606
    %v633 = vadd.f32 %v594, %v606
    %v634 = vadd.f32 %v595, %v606
    %v635 = vadd.f32 %v596, %v606
    %v636 = vadd.f32 %v597, %v606
    %v637 = vadd.f32 %v598, %v606
    %v638 = vadd.f32 %v599, %v606
    %v639 = vadd.f32 %v600, %v606
    %v640 = vmax.f32 %v608, 0.0
    %v641 = vmax.f32 %v609, 0.0
    %v642 = vmax.f32 %v610, 0.0
    %v643 = vmax.f32 %v611, 0.0
    %v644 = vmax.f32 %v612, 0.0
    %v645 = vmax.f32 %v613, 0.0
    %v646 = vmax.f32 %v614, 0.0
    %v647 = vmax.f32 %v615, 0.0
    %v648 = vmax.f32 %v616, 0.0
    %v649 = vmax.f32 %v617, 0.0
    %v650 = vmax.f32 %v618, 0.0
    %v651 = vmax.f32 %v619, 0.0
    %v652 = vmax.f32 %v620, 0.0
    %v653 = vmax.f32 %v621, 0.0
    %v654 = vmax.f32 %v622, 0.0
    %v655 = vmax.f32 %v623, 0.0
    %v656 = vmax.f32 %v624, 0.0
    %v657 = vmax.f32 %v625, 0.0
    %v658 = vmax.f32 %v626, 0.0
    %v659 = vmax.f32 %v627, 0.0
    %v660 = vmax.f32 %v628, 0.0
    %v661 = vmax.f32 %v629, 0.0
    %v662 = vmax.f32 %v630, 0.0
    %v663 = vmax.f32 %v631, 0.0
    %v664 = vmax.f32 %v632, 0.0
    %v665 = vmax.f32 %v633, 0.0
    %v666 = vmax.f32 %v634, 0.0
    %v667 = vmax.f32 %v635, 0.0
    %v668 = vmax.f32 %v636, 0.0
    %v669 = vmax.f32 %v637, 0.0
    %v670 = vmax.f32 %v638, 0.0
    %v671 = vmax.f32 %v639, 0.0
    %v672 = vld [vmem:[%s3] sm:$0xff]
    %v673 = vld [vmem:[%s3 + $0x8] sm:$0xff]
    %v674 = vld [vmem:[%s3 + $0x10] sm:$0xff]
    %v675 = vld [vmem:[%s3 + $0x18] sm:$0xff]
    %v676 = vld [vmem:[%s3 + $0x20] sm:$0xff]
    %v677 = vld [vmem:[%s3 + $0x28] sm:$0xff]
    %v678 = vld [vmem:[%s3 + $0x30] sm:$0xff]
    %v679 = vld [vmem:[%s3 + $0x38] sm:$0xff]
    %v680 = vld [vmem:[%s4] sm:$0x1]
    %v682 = vlaneseq
    %v683 = vshrl.u32 %v682, 7
    %v684 = vsub.s32 0, %v683
    %v685 = vrot.slane %v680, %v684
    %v688 = vsel %vm533, %v640, 0
    %v691 = vsel %vm533, %v641, 0
    %v694 = vsel %vm533, %v642, 0
    %v697 = vsel %vm533, %v643, 0
    %v700 = vsel %vm533, %v644, 0
    %v703 = vsel %vm533, %v645, 0
    %v706 = vsel %vm533, %v646, 0
    %v709 = vsel %vm533, %v647, 0
    %v712 = vsel %vm533, %v648, 0
    %v715 = vsel %vm533, %v649, 0
    %v718 = vsel %vm533, %v650, 0
    %v721 = vsel %vm533, %v651, 0
    %v724 = vsel %vm533, %v652, 0
    %v727 = vsel %vm533, %v653, 0
    %v730 = vsel %vm533, %v654, 0
    %v733 = vsel %vm533, %v655, 0
    %v736 = vsel %vm533, %v656, 0
    %v739 = vsel %vm533, %v657, 0
    %v742 = vsel %vm533, %v658, 0
    %v745 = vsel %vm533, %v659, 0
    %v748 = vsel %vm533, %v660, 0
    %v751 = vsel %vm533, %v661, 0
    %v754 = vsel %vm533, %v662, 0
    %v757 = vsel %vm533, %v663, 0
    %v760 = vsel %vm533, %v664, 0
    %v763 = vsel %vm533, %v665, 0
    %v766 = vsel %vm533, %v666, 0
    %v769 = vsel %vm533, %v667, 0
    %v772 = vsel %vm533, %v668, 0
    %v775 = vsel %vm533, %v669, 0
    %v778 = vsel %vm533, %v670, 0
    %v781 = vsel %vm533, %v671, 0
    %783 = vmatprep.subr.mxu0 0.0
    %784 = vmatpush1.msra.mxu0 %v672
    %785 = vmatprep.subr.mxu0 0.0
    %786 = vmatpush1.msra.mxu0 %v673
    %787 = vmatprep.subr.mxu0 0.0
    %788 = vmatpush1.msra.mxu0 %v674
    %789 = vmatprep.subr.mxu0 0.0
    %790 = vmatpush1.msra.mxu0 %v675
    %791 = vmatprep.subr.mxu0 0.0
    %792 = vmatpush1.msra.mxu0 %v676
    %793 = vmatprep.subr.mxu0 0.0
    %794 = vmatpush1.msra.mxu0 %v677
    %795 = vmatprep.subr.mxu0 0.0
    %796 = vmatpush1.msra.mxu0 %v678
    %797 = vmatprep.subr.mxu0 0.0
    %798 = vmatpush1.msra.mxu0 %v679
    %799 = vmatprep.subr.mxu0 0.0
    %800 = vmatpush1.msra.mxu0 0.0
    %801 = vmatprep.subr.mxu0 0.0
    %802 = vmatpush1.msra.mxu0 0.0
    %803 = vmatprep.subr.mxu0 0.0
    %804 = vmatpush1.msra.mxu0 0.0
    %805 = vmatprep.subr.mxu0 0.0
    %806 = vmatpush1.msra.mxu0 0.0
    %807 = vmatprep.subr.mxu0 0.0
    %808 = vmatpush1.msra.mxu0 0.0
    %809 = vmatprep.subr.mxu0 0.0
    %810 = vmatpush1.msra.mxu0 0.0
    %811 = vmatprep.subr.mxu0 0.0
    %812 = vmatpush1.msra.mxu0 0.0
    %813 = vmatprep.subr.mxu0 0.0
    %814 = vmatpush1.msra.mxu0 0.0
    %815 = vmatprep.subr.mxu0 0.0
    %816 = vmatpush1.msra.mxu0 0.0
    %817 = vmatprep.subr.mxu0 0.0
    %818 = vmatpush1.msra.mxu0 0.0
    %819 = vmatprep.subr.mxu0 0.0
    %820 = vmatpush1.msra.mxu0 0.0
    %821 = vmatprep.subr.mxu0 0.0
    %822 = vmatpush1.msra.mxu0 0.0
    %823 = vmatprep.subr.mxu0 0.0
    %824 = vmatpush1.msra.mxu0 0.0
    %825 = vmatprep.subr.mxu0 0.0
    %826 = vmatpush1.msra.mxu0 0.0
    %827 = vmatprep.subr.mxu0 0.0
    %828 = vmatpush1.msra.mxu0 0.0
    %829 = vmatprep.subr.mxu0 0.0
    %830 = vmatpush1.msra.mxu0 0.0
    %831 = vmatprep.subr.mxu0 0.0
    %832 = vmatpush1.msra.mxu0 0.0
    %833 = vmatprep.subr.mxu0 0.0
    %834 = vmatpush1.msra.mxu0 0.0
    %835 = vmatprep.subr.mxu0 0.0
    %836 = vmatpush1.msra.mxu0 0.0
    %837 = vmatprep.subr.mxu0 0.0
    %838 = vmatpush1.msra.mxu0 0.0
    %839 = vmatprep.subr.mxu0 0.0
    %840 = vmatpush1.msra.mxu0 0.0
    %841 = vmatprep.subr.mxu0 0.0
    %842 = vmatpush1.msra.mxu0 0.0
    %843 = vmatprep.subr.mxu0 0.0
    %844 = vmatpush1.msra.mxu0 0.0
    %845 = vmatprep.subr.mxu0 0.0
    %846 = vmatpush1.msra.mxu0 0.0
    %847 = vmatprep.mubr.f32.mxu0 0.0
    %848 = vmatmul.mubr.f32.gmra.mrb[0].mxu0 %v688
    %v849 = vpop.f32.mrb[0].mxu0
    %v850 = vadd.f32 %v685, %v849
    %v851 = vpop.f32.mrb[0].mxu0
    %852 = vmatprep.mubr.f32.mxu0 0.0
    %853 = vmatmul.mubr.f32.gmra.mrb[0].mxu0 %v691
    %v854 = vpop.f32.mrb[0].mxu0
    %v855 = vadd.f32 %v685, %v854
    %v856 = vpop.f32.mrb[0].mxu0
    %857 = vmatprep.mubr.f32.mxu0 0.0
    %858 = vmatmul.mubr.f32.gmra.mrb[0].mxu0 %v694
    %v859 = vpop.f32.mrb[0].mxu0
    %v860 = vadd.f32 %v685, %v859
    %v861 = vpop.f32.mrb[0].mxu0
    %862 = vmatprep.mubr.f32.mxu0 0.0
    %863 = vmatmul.mubr.f32.gmra.mrb[0].mxu0 %v697
    %v864 = vpop.f32.mrb[0].mxu0
    %v865 = vadd.f32 %v685, %v864
    %v866 = vpop.f32.mrb[0].mxu0
    %867 = vmatprep.mubr.f32.mxu0 0.0
    %868 = vmatmul.mubr.f32.gmra.mrb[0].mxu0 %v700
    %v869 = vpop.f32.mrb[0].mxu0
    %v870 = vadd.f32 %v685, %v869
    %v871 = vpop.f32.mrb[0].mxu0
    %872 = vmatprep.mubr.f32.mxu0 0.0
    %873 = vmatmul.mubr.f32.gmra.mrb[0].mxu0 %v703
    %v874 = vpop.f32.mrb[0].mxu0
    %v875 = vadd.f32 %v685, %v874
    %v876 = vpop.f32.mrb[0].mxu0
    %877 = vmatprep.mubr.f32.mxu0 0.0
    %878 = vmatmul.mubr.f32.gmra.mrb[0].mxu0 %v706
    %v879 = vpop.f32.mrb[0].mxu0
    %v880 = vadd.f32 %v685, %v879
    %v881 = vpop.f32.mrb[0].mxu0
    %882 = vmatprep.mubr.f32.mxu0 0.0
    %883 = vmatmul.mubr.f32.gmra.mrb[0].mxu0 %v709
    %v884 = vpop.f32.mrb[0].mxu0
    %v885 = vadd.f32 %v685, %v884
    %v886 = vpop.f32.mrb[0].mxu0
    %887 = vmatprep.mubr.f32.mxu0 0.0
    %888 = vmatmul.mubr.f32.gmra.mrb[0].mxu0 %v712
    %v889 = vpop.f32.mrb[0].mxu0
    %v890 = vadd.f32 %v685, %v889
    %v891 = vpop.f32.mrb[0].mxu0
    %892 = vmatprep.mubr.f32.mxu0 0.0
    %893 = vmatmul.mubr.f32.gmra.mrb[0].mxu0 %v715
    %v894 = vpop.f32.mrb[0].mxu0
    %v895 = vadd.f32 %v685, %v894
    %v896 = vpop.f32.mrb[0].mxu0
    %897 = vmatprep.mubr.f32.mxu0 0.0
    %898 = vmatmul.mubr.f32.gmra.mrb[0].mxu0 %v718
    %v899 = vpop.f32.mrb[0].mxu0
    %v900 = vadd.f32 %v685, %v899
    %v901 = vpop.f32.mrb[0].mxu0
    %902 = vmatprep.mubr.f32.mxu0 0.0
    %903 = vmatmul.mubr.f32.gmra.mrb[0].mxu0 %v721
    %v904 = vpop.f32.mrb[0].mxu0
    %v905 = vadd.f32 %v685, %v904
    %v906 = vpop.f32.mrb[0].mxu0
    %907 = vmatprep.mubr.f32.mxu0 0.0
    %908 = vmatmul.mubr.f32.gmra.mrb[0].mxu0 %v724
    %v909 = vpop.f32.mrb[0].mxu0
    %v910 = vadd.f32 %v685, %v909
    %v911 = vpop.f32.mrb[0].mxu0
    %912 = vmatprep.mubr.f32.mxu0 0.0
    %913 = vmatmul.mubr.f32.gmra.mrb[0].mxu0 %v727
    %v914 = vpop.f32.mrb[0].mxu0
    %v915 = vadd.f32 %v685, %v914
    %v916 = vpop.f32.mrb[0].mxu0
    %917 = vmatprep.mubr.f32.mxu0 0.0
    %918 = vmatmul.mubr.f32.gmra.mrb[0].mxu0 %v730
    %v919 = vpop.f32.mrb[0].mxu0
    %v920 = vadd.f32 %v685, %v919
    %v921 = vpop.f32.mrb[0].mxu0
    %922 = vmatprep.mubr.f32.mxu0 0.0
    %923 = vmatmul.mubr.f32.gmra.mrb[0].mxu0 %v733
    %v924 = vpop.f32.mrb[0].mxu0
    %v925 = vadd.f32 %v685, %v924
    %v926 = vpop.f32.mrb[0].mxu0
    %927 = vmatprep.mubr.f32.mxu0 0.0
    %928 = vmatmul.mubr.f32.gmra.mrb[0].mxu0 %v736
    %v929 = vpop.f32.mrb[0].mxu0
    %v930 = vadd.f32 %v685, %v929
    %v931 = vpop.f32.mrb[0].mxu0
    %932 = vmatprep.mubr.f32.mxu0 0.0
    %933 = vmatmul.mubr.f32.gmra.mrb[0].mxu0 %v739
    %v934 = vpop.f32.mrb[0].mxu0
    %v935 = vadd.f32 %v685, %v934
    %v936 = vpop.f32.mrb[0].mxu0
    %937 = vmatprep.mubr.f32.mxu0 0.0
    %938 = vmatmul.mubr.f32.gmra.mrb[0].mxu0 %v742
    %v939 = vpop.f32.mrb[0].mxu0
    %v940 = vadd.f32 %v685, %v939
    %v941 = vpop.f32.mrb[0].mxu0
    %942 = vmatprep.mubr.f32.mxu0 0.0
    %943 = vmatmul.mubr.f32.gmra.mrb[0].mxu0 %v745
    %v944 = vpop.f32.mrb[0].mxu0
    %v945 = vadd.f32 %v685, %v944
    %v946 = vpop.f32.mrb[0].mxu0
    %947 = vmatprep.mubr.f32.mxu0 0.0
    %948 = vmatmul.mubr.f32.gmra.mrb[0].mxu0 %v748
    %v949 = vpop.f32.mrb[0].mxu0
    %v950 = vadd.f32 %v685, %v949
    %v951 = vpop.f32.mrb[0].mxu0
    %952 = vmatprep.mubr.f32.mxu0 0.0
    %953 = vmatmul.mubr.f32.gmra.mrb[0].mxu0 %v751
    %v954 = vpop.f32.mrb[0].mxu0
    %v955 = vadd.f32 %v685, %v954
    %v956 = vpop.f32.mrb[0].mxu0
    %957 = vmatprep.mubr.f32.mxu0 0.0
    %958 = vmatmul.mubr.f32.gmra.mrb[0].mxu0 %v754
    %v959 = vpop.f32.mrb[0].mxu0
    %v960 = vadd.f32 %v685, %v959
    %v961 = vpop.f32.mrb[0].mxu0
    %962 = vmatprep.mubr.f32.mxu0 0.0
    %963 = vmatmul.mubr.f32.gmra.mrb[0].mxu0 %v757
    %v964 = vpop.f32.mrb[0].mxu0
    %v965 = vadd.f32 %v685, %v964
    %v966 = vpop.f32.mrb[0].mxu0
    %967 = vmatprep.mubr.f32.mxu0 0.0
    %968 = vmatmul.mubr.f32.gmra.mrb[0].mxu0 %v760
    %v969 = vpop.f32.mrb[0].mxu0
    %v970 = vadd.f32 %v685, %v969
    %v971 = vpop.f32.mrb[0].mxu0
    %972 = vmatprep.mubr.f32.mxu0 0.0
    %973 = vmatmul.mubr.f32.gmra.mrb[0].mxu0 %v763
    %v974 = vpop.f32.mrb[0].mxu0
    %v975 = vadd.f32 %v685, %v974
    %v976 = vpop.f32.mrb[0].mxu0
    %977 = vmatprep.mubr.f32.mxu0 0.0
    %978 = vmatmul.mubr.f32.gmra.mrb[0].mxu0 %v766
    %v979 = vpop.f32.mrb[0].mxu0
    %v980 = vadd.f32 %v685, %v979
    %v981 = vpop.f32.mrb[0].mxu0
    %982 = vmatprep.mubr.f32.mxu0 0.0
    %983 = vmatmul.mubr.f32.gmra.mrb[0].mxu0 %v769
    %v984 = vpop.f32.mrb[0].mxu0
    %v985 = vadd.f32 %v685, %v984
    %v986 = vpop.f32.mrb[0].mxu0
    %987 = vmatprep.mubr.f32.mxu0 0.0
    %988 = vmatmul.mubr.f32.gmra.mrb[0].mxu0 %v772
    %v989 = vpop.f32.mrb[0].mxu0
    %v990 = vadd.f32 %v685, %v989
    %v991 = vpop.f32.mrb[0].mxu0
    %992 = vmatprep.mubr.f32.mxu0 0.0
    %993 = vmatmul.mubr.f32.gmra.mrb[0].mxu0 %v775
    %v994 = vpop.f32.mrb[0].mxu0
    %v995 = vadd.f32 %v685, %v994
    %v996 = vpop.f32.mrb[0].mxu0
    %997 = vmatprep.mubr.f32.mxu0 0.0
    %998 = vmatmul.mubr.f32.gmra.mrb[0].mxu0 %v778
    %v999 = vpop.f32.mrb[0].mxu0
    %v1000 = vadd.f32 %v685, %v999
    %v1001 = vpop.f32.mrb[0].mxu0
    %1002 = vmatprep.mubr.f32.mxu0 0.0
    %1003 = vmatmul.mubr.f32.gmra.mrb[0].mxu0 %v781
    %v1004 = vpop.f32.mrb[0].mxu0
    %v1005 = vadd.f32 %v685, %v1004
    %v1006 = vpop.f32.mrb[0].mxu0
    %1007 = vdwg.mxu0
    %v1008 = vmax.f32 %v850, 0.0
    %v1009 = vmax.f32 %v855, 0.0
    %v1010 = vmax.f32 %v860, 0.0
    %v1011 = vmax.f32 %v865, 0.0
    %v1012 = vmax.f32 %v870, 0.0
    %v1013 = vmax.f32 %v875, 0.0
    %v1014 = vmax.f32 %v880, 0.0
    %v1015 = vmax.f32 %v885, 0.0
    %v1016 = vmax.f32 %v890, 0.0
    %v1017 = vmax.f32 %v895, 0.0
    %v1018 = vmax.f32 %v900, 0.0
    %v1019 = vmax.f32 %v905, 0.0
    %v1020 = vmax.f32 %v910, 0.0
    %v1021 = vmax.f32 %v915, 0.0
    %v1022 = vmax.f32 %v920, 0.0
    %v1023 = vmax.f32 %v925, 0.0
    %v1024 = vmax.f32 %v930, 0.0
    %v1025 = vmax.f32 %v935, 0.0
    %v1026 = vmax.f32 %v940, 0.0
    %v1027 = vmax.f32 %v945, 0.0
    %v1028 = vmax.f32 %v950, 0.0
    %v1029 = vmax.f32 %v955, 0.0
    %v1030 = vmax.f32 %v960, 0.0
    %v1031 = vmax.f32 %v965, 0.0
    %v1032 = vmax.f32 %v970, 0.0
    %v1033 = vmax.f32 %v975, 0.0
    %v1034 = vmax.f32 %v980, 0.0
    %v1035 = vmax.f32 %v985, 0.0
    %v1036 = vmax.f32 %v990, 0.0
    %v1037 = vmax.f32 %v995, 0.0
    %v1038 = vmax.f32 %v1000, 0.0
    %v1039 = vmax.f32 %v1005, 0.0
    %v1040 = vpack.c.bf16 %v1009, %v1008
    %v1041 = vpack.c.bf16 %v1011, %v1010
    %v1042 = vpack.c.bf16 %v1013, %v1012
    %v1043 = vpack.c.bf16 %v1015, %v1014
    %v1044 = vpack.c.bf16 %v1017, %v1016
    %v1045 = vpack.c.bf16 %v1019, %v1018
    %v1046 = vpack.c.bf16 %v1021, %v1020
    %v1047 = vpack.c.bf16 %v1023, %v1022
    %v1048 = vpack.c.bf16 %v1025, %v1024
    %v1049 = vpack.c.bf16 %v1027, %v1026
    %v1050 = vpack.c.bf16 %v1029, %v1028
    %v1051 = vpack.c.bf16 %v1031, %v1030
    %v1052 = vpack.c.bf16 %v1033, %v1032
    %v1053 = vpack.c.bf16 %v1035, %v1034
    %v1054 = vpack.c.bf16 %v1037, %v1036
    %v1055 = vpack.c.bf16 %v1039, %v1038
    %v1072 = vunpack.c.l.b16 %v1040
    %v1073 = vunpack.c.h.b16 %v1040
    %v1074 = vunpack.c.l.b16 %v1041
    %v1075 = vunpack.c.h.b16 %v1041
    %v1076 = vunpack.c.l.b16 %v1042
    %v1077 = vunpack.c.h.b16 %v1042
    %v1078 = vunpack.c.l.b16 %v1043
    %v1079 = vunpack.c.h.b16 %v1043
    %v1080 = vunpack.c.l.b16 %v1044
    %v1081 = vunpack.c.h.b16 %v1044
    %v1082 = vunpack.c.l.b16 %v1045
    %v1083 = vunpack.c.h.b16 %v1045
    %v1084 = vunpack.c.l.b16 %v1046
    %v1085 = vunpack.c.h.b16 %v1046
    %v1086 = vunpack.c.l.b16 %v1047
    %v1087 = vunpack.c.h.b16 %v1047
    %v1088 = vunpack.c.l.b16 %v1048
    %v1089 = vunpack.c.h.b16 %v1048
    %v1090 = vunpack.c.l.b16 %v1049
    %v1091 = vunpack.c.h.b16 %v1049
    %v1092 = vunpack.c.l.b16 %v1050
    %v1093 = vunpack.c.h.b16 %v1050
    %v1094 = vunpack.c.l.b16 %v1051
    %v1095 = vunpack.c.h.b16 %v1051
    %v1096 = vunpack.c.l.b16 %v1052
    %v1097 = vunpack.c.h.b16 %v1052
    %v1098 = vunpack.c.l.b16 %v1053
    %v1099 = vunpack.c.h.b16 %v1053
    %v1100 = vunpack.c.l.b16 %v1054
    %v1101 = vunpack.c.h.b16 %v1054
    %v1102 = vunpack.c.l.b16 %v1055
    %v1103 = vunpack.c.h.b16 %v1055
    %v1104 = vpack.c.b16 %v1072, %v1072
    %v1105 = vpack.c.b16 %v1073, %v1073
    %v1106 = vpack.c.b16 %v1074, %v1074
    %v1107 = vpack.c.b16 %v1075, %v1075
    %v1108 = vpack.c.b16 %v1076, %v1076
    %v1109 = vpack.c.b16 %v1077, %v1077
    %v1110 = vpack.c.b16 %v1078, %v1078
    %v1111 = vpack.c.b16 %v1079, %v1079
    %v1112 = vpack.c.b16 %v1080, %v1080
    %v1113 = vpack.c.b16 %v1081, %v1081
    %v1114 = vpack.c.b16 %v1082, %v1082
    %v1115 = vpack.c.b16 %v1083, %v1083
    %v1116 = vpack.c.b16 %v1084, %v1084
    %v1117 = vpack.c.b16 %v1085, %v1085
    %v1118 = vpack.c.b16 %v1086, %v1086
    %v1119 = vpack.c.b16 %v1087, %v1087
    %v1120 = vpack.c.b16 %v1088, %v1088
    %v1121 = vpack.c.b16 %v1089, %v1089
    %v1122 = vpack.c.b16 %v1090, %v1090
    %v1123 = vpack.c.b16 %v1091, %v1091
    %v1124 = vpack.c.b16 %v1092, %v1092
    %v1125 = vpack.c.b16 %v1093, %v1093
    %v1126 = vpack.c.b16 %v1094, %v1094
    %v1127 = vpack.c.b16 %v1095, %v1095
    %v1128 = vpack.c.b16 %v1096, %v1096
    %v1129 = vpack.c.b16 %v1097, %v1097
    %v1130 = vpack.c.b16 %v1098, %v1098
    %v1131 = vpack.c.b16 %v1099, %v1099
    %v1132 = vpack.c.b16 %v1100, %v1100
    %v1133 = vpack.c.b16 %v1101, %v1101
    %v1134 = vpack.c.b16 %v1102, %v1102
    %v1135 = vpack.c.b16 %v1103, %v1103
    %vm1168 = vcmask 519168
    %1169 = vst.msk [vmem:[%s5] sm:$0xf] %vm1168, %v1104
    %1170 = vst.msk [vmem:[%s5 + $0x4] sm:$0xf] %vm1168, %v1105
    %1171 = vst.msk [vmem:[%s5 + $0x8] sm:$0xf] %vm1168, %v1106
    %1172 = vst.msk [vmem:[%s5 + $0xc] sm:$0xf] %vm1168, %v1107
    %1173 = vst.msk [vmem:[%s5 + $0x10] sm:$0xf] %vm1168, %v1108
    %1174 = vst.msk [vmem:[%s5 + $0x14] sm:$0xf] %vm1168, %v1109
    %1175 = vst.msk [vmem:[%s5 + $0x18] sm:$0xf] %vm1168, %v1110
    %1176 = vst.msk [vmem:[%s5 + $0x1c] sm:$0xf] %vm1168, %v1111
    %1177 = vst.msk [vmem:[%s5 + $0x20] sm:$0xf] %vm1168, %v1112
    %1178 = vst.msk [vmem:[%s5 + $0x24] sm:$0xf] %vm1168, %v1113
    %1179 = vst.msk [vmem:[%s5 + $0x28] sm:$0xf] %vm1168, %v1114
    %1180 = vst.msk [vmem:[%s5 + $0x2c] sm:$0xf] %vm1168, %v1115
    %1181 = vst.msk [vmem:[%s5 + $0x30] sm:$0xf] %vm1168, %v1116
    %1182 = vst.msk [vmem:[%s5 + $0x34] sm:$0xf] %vm1168, %v1117
    %1183 = vst.msk [vmem:[%s5 + $0x38] sm:$0xf] %vm1168, %v1118
    %1184 = vst.msk [vmem:[%s5 + $0x3c] sm:$0xf] %vm1168, %v1119
    %1185 = vst.msk [vmem:[%s5 + $0x40] sm:$0xf] %vm1168, %v1120
    %1186 = vst.msk [vmem:[%s5 + $0x44] sm:$0xf] %vm1168, %v1121
    %1187 = vst.msk [vmem:[%s5 + $0x48] sm:$0xf] %vm1168, %v1122
    %1188 = vst.msk [vmem:[%s5 + $0x4c] sm:$0xf] %vm1168, %v1123
    %1189 = vst.msk [vmem:[%s5 + $0x50] sm:$0xf] %vm1168, %v1124
    %1190 = vst.msk [vmem:[%s5 + $0x54] sm:$0xf] %vm1168, %v1125
    %1191 = vst.msk [vmem:[%s5 + $0x58] sm:$0xf] %vm1168, %v1126
    %1192 = vst.msk [vmem:[%s5 + $0x5c] sm:$0xf] %vm1168, %v1127
    %1193 = vst.msk [vmem:[%s5 + $0x60] sm:$0xf] %vm1168, %v1128
    %1194 = vst.msk [vmem:[%s5 + $0x64] sm:$0xf] %vm1168, %v1129
    %1195 = vst.msk [vmem:[%s5 + $0x68] sm:$0xf] %vm1168, %v1130
    %1196 = vst.msk [vmem:[%s5 + $0x6c] sm:$0xf] %vm1168, %v1131
    %1197 = vst.msk [vmem:[%s5 + $0x70] sm:$0xf] %vm1168, %v1132
    %1198 = vst.msk [vmem:[%s5 + $0x74] sm:$0xf] %vm1168, %v1133
    %1199 = vst.msk [vmem:[%s5 + $0x78] sm:$0xf] %vm1168, %v1134
    %1200 = vst.msk [vmem:[%s5 + $0x7c] sm:$0xf] %vm1168, %v1135
  $region29: #{tpu_custom_call.1} parent=0 // pred_fallthru
    _
  // Predicated region
  $region30: #{tpu_custom_call.1} parent=0 // pred_check
    _
  $region31: #{tpu_custom_call.1} parent=0 // pred_check_branch
    %1202 = sbr.rel (0) target = $region33
  $region32: #{tpu_custom_call.1} parent=0 // pred_region
    _
  $region33: #{tpu_custom_call.1} parent=0 // pred_fallthru
    _
  // Predicated region
  $region34: #{tpu_custom_call.1} parent=0 // pred_check
    _
  $region35: #{tpu_custom_call.1} parent=0 // pred_check_branch
    %1204 = sbr.rel (0) target = $region37
  $region36: #{tpu_custom_call.1} parent=0 // pred_region
    _
  $region37: #{tpu_custom_call.1} parent=0 // pred_fallthru
    _

</llo_original>
